<compile_context>
chip_gen: v5e
topology: v5e:2x2
jax: 0.10.0
libtpu: 0.0.40
codegen_flags: <defaults>
</compile_context>

<pallas_src>
import functools

import jax
import jax.numpy as jnp
from jax import lax
from jax.experimental import pallas as pl
from jax.experimental.pallas import tpu as pltpu


def _round_up(x: int, m: int) -> int:
    return ((x + m - 1) // m) * m


def _vmem_budget_bytes() -> int:
    """VMEM budget for this kernel, with headroom below physical capacity."""
    try:
        phys = pltpu.get_tpu_info().vmem_capacity_bytes  # 128 MiB v5e/v6e, 64 MiB v7x
    except Exception:
        phys = 64 << 20                                  # conservative (v7x) fallback
    return int(min((phys * 3) // 4, 96 << 20))


def _align_tile(tm: int, batch: int) -> int:
    """MXU-friendly rounding of the query-row tile (256-mult on v6e/v7x, 128 on v5e)."""
    cap = _round_up(batch, 8)
    if tm >= cap:
        return cap
    if tm >= 256:
        tm = (tm // 256) * 256
    elif tm >= 128:
        tm = (tm // 128) * 128
    else:
        tm = (tm // 8) * 8
    return max(int(tm), 8)


def _pick_tile_rows(batch: int, dim: int, n_pos: int, n_neg: int,
                    itemsize: int, budget: int) -> int:
    """Largest query-row tile whose working set fits the VMEM budget."""
    dpad = _round_up(dim, 128)
    lanes_p = _round_up(n_pos, 128)
    lanes_n = _round_up(n_neg, 128) if n_neg else 0
    # Resident, single-buffered (pl.Buffered(1)) candidate blocks + (1,N) inv-norm vectors.
    resident = (_round_up(n_pos, 8) + _round_up(n_neg, 8)) * dpad * itemsize
    resident += 8 * (lanes_p + lanes_n) * 4
    # Per query row of one tile step.
    per_row = (2 * 2 * dpad * itemsize        # q tile + aligned positive tile, double-buffered
               + 2 * 128 * 4                  # (tm,1) f32 output block (lane-padded), x2 bufs
               + 3 * (lanes_p + lanes_n) * 4  # f32 score / exp temporaries
               + 16 * 4)                      # small per-row f32 vectors
    avail = budget - resident - (2 << 20)
    if avail < per_row * 8:
        # TODO(synk): candidate-axis streaming with online softmax for candidate matrices
        # that do not fit in VMEM (large B+Bn on v7x's 64 MiB); currently falls back to
        # the smallest query tile with full candidate residency.
        return 8
    tm = min(avail // per_row, 2048)
    return _align_tile(int(tm), batch)


def _ranking_kernel(q_ref, pd_ref, p_ref, invp_ref, *rest,
                    temperature: float, has_negative: bool):
    if has_negative:
        n_ref, invn_ref, out_ref = rest
    else:
        n_ref = invn_ref = None
        (out_ref,) = rest

    eps = jnp.float32(1e-12)                  # torch.nn.functional.normalize default eps
    inv_t = jnp.float32(1.0 / temperature)

    # MXU operands stay in the input dtype; f32 only for the small per-tile vectors.
    q_raw = q_ref[...]                                            # (tm, D)
    q32 = q_raw.astype(jnp.float32)
    inv_q = 1.0 / jnp.maximum(
        jnp.sqrt(jnp.sum(q32 * q32, axis=-1, keepdims=True)), eps)     # (tm, 1)

    # Correct-class logit via a direct diagonal dot with the aligned positive row tile.
    pd32 = pd_ref[...].astype(jnp.float32)                        # (tm, D)
    inv_pd = 1.0 / jnp.maximum(
        jnp.sqrt(jnp.sum(pd32 * pd32, axis=-1, keepdims=True)), eps)   # (tm, 1)
    raw_diag = jnp.sum(q32 * pd32, axis=-1, keepdims=True)        # (tm, 1)
    correct = raw_diag * (inv_q * inv_pd * inv_t)                 # (tm, 1)

    dn = (((1,), (1,)), ((), ()))                                 # contract on D: q @ cand.T
    row_scale = inv_q * inv_t                                     # (tm, 1)

    scores_p = lax.dot_general(q_raw, p_ref[...], dn,
                               preferred_element_type=jnp.float32)
    scores_p = scores_p * row_scale * invp_ref[...]               # (tm, B): row + lane scale

    m = jnp.max(scores_p, axis=-1, keepdims=True)
    if has_negative:
        scores_n = lax.dot_general(q_raw, n_ref[...], dn,
                                   preferred_element_type=jnp.float32)
        scores_n = scores_n * row_scale * invn_ref[...]           # (tm, Bn)
        m = jnp.maximum(m, jnp.max(scores_n, axis=-1, keepdims=True))
        sum_exp = (jnp.sum(jnp.exp(scores_p - m), axis=-1, keepdims=True)
                   + jnp.sum(jnp.exp(scores_n - m), axis=-1, keepdims=True))
    else:
        sum_exp = jnp.sum(jnp.exp(scores_p - m), axis=-1, keepdims=True)

    # Per-row cross entropy; ragged last tile handled by Pallas clipping the output block.
    out_ref[...] = (m + jnp.log(sum_exp)) - correct               # (tm, 1)


def _inv_l2_norm(x: jax.Array) -> jax.Array:
    """Per-row inverse L2 norm, once, as a (1, N) f32 lane vector (F.normalize eps)."""
    x32 = x.astype(jnp.float32)
    norm = jnp.sqrt(jnp.sum(x32 * x32, axis=-1))
    return (1.0 / jnp.maximum(norm, jnp.float32(1e-12)))[None, :]


def triplet_ranking_loss(query_embedding: jax.Array,
                         positive_embedding: jax.Array,
                         negative_embedding: jax.Array | None = None,
                         *,
                         temperature: float = 0.05,
                         tile_rows: int | None = None) -> jax.Array:
    """TripletRankingLoss forward (use_inbatch_negative=True path)."""
    # TODO(synk): use_inbatch_negative=False branch (grouped per-query negatives) not implemented.
    B, D = query_embedding.shape
    assert positive_embedding.shape == (B, D)
    has_negative = negative_embedding is not None
    Bn = 0
    if has_negative:
        assert negative_embedding.shape[1] == D
        Bn = negative_embedding.shape[0]

    itemsize = jnp.dtype(query_embedding.dtype).itemsize
    budget = _vmem_budget_bytes()
    if tile_rows is None:
        tm = _pick_tile_rows(B, D, B, Bn, itemsize, budget)
    else:
        tm = max(8, (int(tile_rows) // 8) * 8)
    grid = (pl.cdiv(B, tm),)

    # One-time per-candidate inverse norms (tiny (1, N) f32 vectors).
    inv_p = _inv_l2_norm(positive_embedding)
    inputs = [query_embedding, positive_embedding, positive_embedding, inv_p]
    if has_negative:
        inputs += [negative_embedding, _inv_l2_norm(negative_embedding)]

    kernel = functools.partial(_ranking_kernel, temperature=float(temperature),
                               has_negative=has_negative)

    def _build_specs(single_buffer: bool):
        def resident(shape):
            # Constant index_map -> block fetched once; single buffer halves resident VMEM.
            if single_buffer:
                return pl.BlockSpec(shape, lambda i: (0, 0),
                                    pipeline_mode=pl.Buffered(1))
            return pl.BlockSpec(shape, lambda i: (0, 0))

        specs = [
            pl.BlockSpec((tm, D), lambda i: (i, 0)),   # query row tile
            pl.BlockSpec((tm, D), lambda i: (i, 0)),   # aligned positive tile (diagonal)
            resident((B, D)),                          # positives: resident
            resident((1, B)),                          # positive inverse norms
        ]
        if has_negative:
            specs += [resident((Bn, D)),               # negatives: resident
                      resident((1, Bn))]               # negative inverse norms
        return specs

    def _run(single_buffer: bool):
        return pl.pallas_call(
            kernel,
            out_shape=jax.ShapeDtypeStruct((B, 1), jnp.float32),
            grid_spec=pltpu.PrefetchScalarGridSpec(
                num_scalar_prefetch=0,
                grid=grid,
                in_specs=_build_specs(single_buffer),
                out_specs=pl.BlockSpec((tm, 1), lambda i: (i, 0)),
            ),
            compiler_params=pltpu.CompilerParams(
                dimension_semantics=("parallel",),     # independent steps -> megacore on v7x
                vmem_limit_bytes=budget),
        )(*inputs)

    try:
        per_row = _run(True)
    except Exception:
        # pl.Buffered(1) not available on this jax version -> default double buffering.
        per_row = _run(False)

    return jnp.sum(per_row) / jnp.float32(B)           # CrossEntropyLoss(reduction='mean')


def _reference(q, p, n=None, temperature=0.05):
    def _norm(x):
        x = x.astype(jnp.float32)
        return x / jnp.maximum(jnp.linalg.norm(x, axis=-1, keepdims=True), 1e-12)

    qn = _norm(q)
    cand = _norm(p)
    if n is not None:
        cand = jnp.concatenate([cand, _norm(n)], axis=0)
    scores = jnp.einsum("id,jd->ij", qn, cand,
                        precision=jax.lax.Precision.HIGHEST) / temperature
    labels = jnp.arange(q.shape[0])
    lse = jax.scipy.special.logsumexp(scores, axis=-1)
    return jnp.mean(lse - scores[labels, labels])


if __name__ == "__main__":
    key = jax.random.PRNGKey(0)
    kq, kp, kn = jax.random.split(key, 3)
    B, D = 8, 32
    q = jax.random.normal(kq, (B, D), dtype=jnp.float32)
    p = jax.random.normal(kp, (B, D), dtype=jnp.float32)
    n = jax.random.normal(kn, (B, D), dtype=jnp.float32)

    # 1) default path: in-batch negatives + explicit negatives
    loss = jax.block_until_ready(triplet_ranking_loss(q, p, n, temperature=0.05))
    ref = _reference(q, p, n, temperature=0.05)
    assert jnp.allclose(loss, ref, rtol=5e-3, atol=5e-3), (loss, ref)

    # 2) no explicit negatives (in-batch positives only)
    loss2 = jax.block_until_ready(triplet_ranking_loss(q, p, None, temperature=0.05))
    ref2 = _reference(q, p, None, temperature=0.05)
    assert jnp.allclose(loss2, ref2, rtol=5e-3, atol=5e-3), (loss2, ref2)

    # 3) ragged batch: multi-step grid, last output block clipped by Pallas
    B2 = 12
    k2q, k2p, k2n = jax.random.split(jax.random.PRNGKey(1), 3)
    q2 = jax.random.normal(k2q, (B2, D), dtype=jnp.float32)
    p2 = jax.random.normal(k2p, (B2, D), dtype=jnp.float32)
    n2 = jax.random.normal(k2n, (B2, D), dtype=jnp.float32)
    loss3 = jax.block_until_ready(
        triplet_ranking_loss(q2, p2, n2, temperature=0.05, tile_rows=8))
    ref3 = _reference(q2, p2, n2, temperature=0.05)
    assert jnp.allclose(loss3, ref3, rtol=5e-3, atol=5e-3), (loss3, ref3)

    # 4) bf16 inputs: MXU operands stay bf16 (no f32 upcast of the candidate matrix)
    qb, pb, nb = (x.astype(jnp.bfloat16) for x in (q, p, n))
    loss4 = jax.block_until_ready(triplet_ranking_loss(qb, pb, nb, temperature=0.05))
    ref4 = _reference(qb, pb, nb, temperature=0.05)
    assert jnp.allclose(loss4, ref4, rtol=1e-2, atol=1e-2), (loss4, ref4)

    print("KERNEL_OK")
</pallas_src>

<mosaic_0001>
module attributes {stable_mosaic.version = 11 : i64} {
  func.func @_ranking_kernel(%arg0: i32, %arg1: memref<8x32xf32, #tpu.memory_space<vmem>>, %arg2: memref<8x32xf32, #tpu.memory_space<vmem>>, %arg3: memref<8x32xf32, #tpu.memory_space<vmem>>, %arg4: memref<1x8xf32, #tpu.memory_space<vmem>>, %arg5: memref<8x32xf32, #tpu.memory_space<vmem>>, %arg6: memref<1x8xf32, #tpu.memory_space<vmem>>, %arg7: memref<8x1xf32, #tpu.memory_space<vmem>>) attributes {dimension_semantics = [#tpu.dimension_semantics<parallel>], iteration_bounds = array<i64: 1>, scalar_prefetch = 0 : i64, scratch_operands = 0 : i64, tpu.core_type = #tpu.core_type<tc>, window_params = [{transform_indices = @transform_0, window_bounds = array<i64: 8, 32>}, {transform_indices = @transform_1, window_bounds = array<i64: 8, 32>}, {pipeline_mode = #tpu.pipeline_mode<synchronous>, transform_indices = @transform_2, window_bounds = array<i64: 8, 32>}, {pipeline_mode = #tpu.pipeline_mode<synchronous>, transform_indices = @transform_3, window_bounds = array<i64: 1, 8>}, {pipeline_mode = #tpu.pipeline_mode<synchronous>, transform_indices = @transform_4, window_bounds = array<i64: 8, 32>}, {pipeline_mode = #tpu.pipeline_mode<synchronous>, transform_indices = @transform_5, window_bounds = array<i64: 1, 8>}, {transform_indices = @transform_6, window_bounds = array<i64: 8, 1>}]} {
    %c0 = arith.constant 0 : index
    %c0_0 = arith.constant 0 : index
    %0 = vector.load %arg1[%c0, %c0_0] : memref<8x32xf32, #tpu.memory_space<vmem>>, vector<8x32xf32>
    %1 = arith.mulf %0, %0 : vector<8x32xf32>
    %cst = arith.constant dense<0.000000e+00> : vector<8xf32>
    %2 = vector.multi_reduction <add>, %1, %cst [1] : vector<8x32xf32> to vector<8xf32>
    %3 = vector.shape_cast %2 : vector<8xf32> to vector<8x1xf32>
    %4 = math.sqrt %3 : vector<8x1xf32>
    %cst_1 = arith.constant 9.99999996E-13 : f32
    %5 = vector.broadcast %cst_1 : f32 to vector<8x1xf32>
    %6 = arith.maximumf %4, %5 : vector<8x1xf32>
    %cst_2 = arith.constant 1.000000e+00 : f32
    %7 = vector.broadcast %cst_2 : f32 to vector<8x1xf32>
    %8 = arith.divf %7, %6 : vector<8x1xf32>
    %c0_3 = arith.constant 0 : index
    %c0_4 = arith.constant 0 : index
    %9 = vector.load %arg2[%c0_3, %c0_4] : memref<8x32xf32, #tpu.memory_space<vmem>>, vector<8x32xf32>
    %10 = arith.mulf %9, %9 : vector<8x32xf32>
    %cst_5 = arith.constant dense<0.000000e+00> : vector<8xf32>
    %11 = vector.multi_reduction <add>, %10, %cst_5 [1] : vector<8x32xf32> to vector<8xf32>
    %12 = vector.shape_cast %11 : vector<8xf32> to vector<8x1xf32>
    %13 = math.sqrt %12 : vector<8x1xf32>
    %cst_6 = arith.constant 9.99999996E-13 : f32
    %14 = vector.broadcast %cst_6 : f32 to vector<8x1xf32>
    %15 = arith.maximumf %13, %14 : vector<8x1xf32>
    %cst_7 = arith.constant 1.000000e+00 : f32
    %16 = vector.broadcast %cst_7 : f32 to vector<8x1xf32>
    %17 = arith.divf %16, %15 : vector<8x1xf32>
    %18 = arith.mulf %0, %9 : vector<8x32xf32>
    %cst_8 = arith.constant dense<0.000000e+00> : vector<8xf32>
    %19 = vector.multi_reduction <add>, %18, %cst_8 [1] : vector<8x32xf32> to vector<8xf32>
    %20 = vector.shape_cast %19 : vector<8xf32> to vector<8x1xf32>
    %21 = arith.mulf %8, %17 : vector<8x1xf32>
    %cst_9 = arith.constant 2.000000e+01 : f32
    %22 = vector.broadcast %cst_9 : f32 to vector<8x1xf32>
    %23 = arith.mulf %21, %22 : vector<8x1xf32>
    %24 = arith.mulf %20, %23 : vector<8x1xf32>
    %cst_10 = arith.constant 2.000000e+01 : f32
    %25 = vector.broadcast %cst_10 : f32 to vector<8x1xf32>
    %26 = arith.mulf %8, %25 : vector<8x1xf32>
    %c0_11 = arith.constant 0 : index
    %c0_12 = arith.constant 0 : index
    %27 = vector.load %arg3[%c0_11, %c0_12] : memref<8x32xf32, #tpu.memory_space<vmem>>, vector<8x32xf32>
    %cst_13 = arith.constant dense<0.000000e+00> : vector<8x8xf32>
    %28 = tpu.matmul %0, %27, %cst_13 {dimension_numbers = #tpu.dot_dimension_numbers<[1], [1], [0], [0], [0, 0, 1, 0], [], []>} : vector<8x32xf32>, vector<8x32xf32>, vector<8x8xf32> -> vector<8x8xf32>
    %29 = vector.broadcast %26 : vector<8x1xf32> to vector<8x8xf32>
    %30 = arith.mulf %28, %29 : vector<8x8xf32>
    %c0_14 = arith.constant 0 : index
    %c0_15 = arith.constant 0 : index
    %31 = vector.load %arg4[%c0_14, %c0_15] : memref<1x8xf32, #tpu.memory_space<vmem>>, vector<1x8xf32>
    %32 = vector.broadcast %31 : vector<1x8xf32> to vector<8x8xf32>
    %33 = arith.mulf %30, %32 : vector<8x8xf32>
    %cst_16 = arith.constant dense<0xFF800000> : vector<8xf32>
    %34 = vector.multi_reduction <maximumf>, %33, %cst_16 [1] : vector<8x8xf32> to vector<8xf32>
    %35 = vector.shape_cast %34 : vector<8xf32> to vector<8x1xf32>
    %c0_17 = arith.constant 0 : index
    %c0_18 = arith.constant 0 : index
    %36 = vector.load %arg5[%c0_17, %c0_18] : memref<8x32xf32, #tpu.memory_space<vmem>>, vector<8x32xf32>
    %cst_19 = arith.constant dense<0.000000e+00> : vector<8x8xf32>
    %37 = tpu.matmul %0, %36, %cst_19 {dimension_numbers = #tpu.dot_dimension_numbers<[1], [1], [0], [0], [0, 0, 1, 0], [], []>} : vector<8x32xf32>, vector<8x32xf32>, vector<8x8xf32> -> vector<8x8xf32>
    %38 = vector.broadcast %26 : vector<8x1xf32> to vector<8x8xf32>
    %39 = arith.mulf %37, %38 : vector<8x8xf32>
    %c0_20 = arith.constant 0 : index
    %c0_21 = arith.constant 0 : index
    %40 = vector.load %arg6[%c0_20, %c0_21] : memref<1x8xf32, #tpu.memory_space<vmem>>, vector<1x8xf32>
    %41 = vector.broadcast %40 : vector<1x8xf32> to vector<8x8xf32>
    %42 = arith.mulf %39, %41 : vector<8x8xf32>
    %cst_22 = arith.constant dense<0xFF800000> : vector<8xf32>
    %43 = vector.multi_reduction <maximumf>, %42, %cst_22 [1] : vector<8x8xf32> to vector<8xf32>
    %44 = vector.shape_cast %43 : vector<8xf32> to vector<8x1xf32>
    %45 = arith.maximumf %35, %44 : vector<8x1xf32>
    %46 = vector.broadcast %45 : vector<8x1xf32> to vector<8x8xf32>
    %47 = arith.subf %33, %46 : vector<8x8xf32>
    %48 = math.exp %47 : vector<8x8xf32>
    %cst_23 = arith.constant dense<0.000000e+00> : vector<8xf32>
    %49 = vector.multi_reduction <add>, %48, %cst_23 [1] : vector<8x8xf32> to vector<8xf32>
    %50 = vector.shape_cast %49 : vector<8xf32> to vector<8x1xf32>
    %51 = vector.broadcast %45 : vector<8x1xf32> to vector<8x8xf32>
    %52 = arith.subf %42, %51 : vector<8x8xf32>
    %53 = math.exp %52 : vector<8x8xf32>
    %cst_24 = arith.constant dense<0.000000e+00> : vector<8xf32>
    %54 = vector.multi_reduction <add>, %53, %cst_24 [1] : vector<8x8xf32> to vector<8xf32>
    %55 = vector.shape_cast %54 : vector<8xf32> to vector<8x1xf32>
    %56 = arith.addf %50, %55 : vector<8x1xf32>
    %57 = math.log %56 : vector<8x1xf32>
    %58 = arith.addf %45, %57 : vector<8x1xf32>
    %59 = arith.subf %58, %24 : vector<8x1xf32>
    %c0_25 = arith.constant 0 : index
    %c0_26 = arith.constant 0 : index
    %60 = vector.load %arg7[%c0_25, %c0_26] : memref<8x1xf32, #tpu.memory_space<vmem>>, vector<8x1xf32>
    tpu.vector_store %arg7[%c0_25, %c0_26], %59 {strides = array<i32>} : memref<8x1xf32, #tpu.memory_space<vmem>>, vector<8x1xf32>,
    return
  }
  func.func @transform_0(%arg0: i32) -> (i32, i32) {
    %c0_i32 = arith.constant 0 : i32
    %c0_i32_0 = arith.constant 0 : i32
    return %arg0, %c0_i32 : i32, i32
  }
  func.func @transform_1(%arg0: i32) -> (i32, i32) {
    %c0_i32 = arith.constant 0 : i32
    %c0_i32_0 = arith.constant 0 : i32
    return %arg0, %c0_i32 : i32, i32
  }
  func.func @transform_2(%arg0: i32) -> (i32, i32) {
    %c0_i32 = arith.constant 0 : i32
    %c0_i32_0 = arith.constant 0 : i32
    %c0_i32_1 = arith.constant 0 : i32
    return %c0_i32, %c0_i32_0 : i32, i32
  }
  func.func @transform_3(%arg0: i32) -> (i32, i32) {
    %c0_i32 = arith.constant 0 : i32
    %c0_i32_0 = arith.constant 0 : i32
    %c0_i32_1 = arith.constant 0 : i32
    return %c0_i32, %c0_i32_0 : i32, i32
  }
  func.func @transform_4(%arg0: i32) -> (i32, i32) {
    %c0_i32 = arith.constant 0 : i32
    %c0_i32_0 = arith.constant 0 : i32
    %c0_i32_1 = arith.constant 0 : i32
    return %c0_i32, %c0_i32_0 : i32, i32
  }
  func.func @transform_5(%arg0: i32) -> (i32, i32) {
    %c0_i32 = arith.constant 0 : i32
    %c0_i32_0 = arith.constant 0 : i32
    %c0_i32_1 = arith.constant 0 : i32
    return %c0_i32, %c0_i32_0 : i32, i32
  }
  func.func @transform_6(%arg0: i32) -> (i32, i32) {
    %c0_i32 = arith.constant 0 : i32
    %c0_i32_0 = arith.constant 0 : i32
    return %arg0, %c0_i32 : i32, i32
  }
}

module attributes {stable_mosaic.version = 11 : i64} {
  func.func @_ranking_kernel(%arg0: i32, %arg1: memref<8x32xf32, #tpu.memory_space<vmem>>, %arg2: memref<8x32xf32, #tpu.memory_space<vmem>>, %arg3: memref<8x32xf32, #tpu.memory_space<vmem>>, %arg4: memref<1x8xf32, #tpu.memory_space<vmem>>, %arg5: memref<8x32xf32, #tpu.memory_space<vmem>>, %arg6: memref<1x8xf32, #tpu.memory_space<vmem>>, %arg7: memref<8x1xf32, #tpu.memory_space<vmem>>) attributes {dimension_semantics = [#tpu.dimension_semantics<parallel>], iteration_bounds = array<i64: 1>, scalar_prefetch = 0 : i64, scratch_operands = 0 : i64, tpu.core_type = #tpu.core_type<tc>, window_params = [{transform_indices = @transform_0, window_bounds = array<i64: 8, 32>}, {transform_indices = @transform_1, window_bounds = array<i64: 8, 32>}, {pipeline_mode = #tpu.pipeline_mode<synchronous>, transform_indices = @transform_2, window_bounds = array<i64: 8, 32>}, {pipeline_mode = #tpu.pipeline_mode<synchronous>, transform_indices = @transform_3, window_bounds = array<i64: 1, 8>}, {pipeline_mode = #tpu.pipeline_mode<synchronous>, transform_indices = @transform_4, window_bounds = array<i64: 8, 32>}, {pipeline_mode = #tpu.pipeline_mode<synchronous>, transform_indices = @transform_5, window_bounds = array<i64: 1, 8>}, {transform_indices = @transform_6, window_bounds = array<i64: 8, 1>}]} {
    %c0 = arith.constant 0 : index
    %c0_0 = arith.constant 0 : index
    %0 = vector.load %arg1[%c0, %c0_0] : memref<8x32xf32, #tpu.memory_space<vmem>>, vector<8x32xf32>
    %1 = arith.mulf %0, %0 : vector<8x32xf32>
    %cst = arith.constant dense<0.000000e+00> : vector<8xf32>
    %2 = vector.multi_reduction <add>, %1, %cst [1] : vector<8x32xf32> to vector<8xf32>
    %3 = vector.shape_cast %2 : vector<8xf32> to vector<8x1xf32>
    %4 = math.sqrt %3 : vector<8x1xf32>
    %cst_1 = arith.constant 9.99999996E-13 : f32
    %5 = vector.broadcast %cst_1 : f32 to vector<8x1xf32>
    %6 = arith.maximumf %4, %5 : vector<8x1xf32>
    %cst_2 = arith.constant 1.000000e+00 : f32
    %7 = vector.broadcast %cst_2 : f32 to vector<8x1xf32>
    %8 = arith.divf %7, %6 : vector<8x1xf32>
    %c0_3 = arith.constant 0 : index
    %c0_4 = arith.constant 0 : index
    %9 = vector.load %arg2[%c0_3, %c0_4] : memref<8x32xf32, #tpu.memory_space<vmem>>, vector<8x32xf32>
    %10 = arith.mulf %9, %9 : vector<8x32xf32>
    %cst_5 = arith.constant dense<0.000000e+00> : vector<8xf32>
    %11 = vector.multi_reduction <add>, %10, %cst_5 [1] : vector<8x32xf32> to vector<8xf32>
    %12 = vector.shape_cast %11 : vector<8xf32> to vector<8x1xf32>
    %13 = math.sqrt %12 : vector<8x1xf32>
    %cst_6 = arith.constant 9.99999996E-13 : f32
    %14 = vector.broadcast %cst_6 : f32 to vector<8x1xf32>
    %15 = arith.maximumf %13, %14 : vector<8x1xf32>
    %cst_7 = arith.constant 1.000000e+00 : f32
    %16 = vector.broadcast %cst_7 : f32 to vector<8x1xf32>
    %17 = arith.divf %16, %15 : vector<8x1xf32>
    %18 = arith.mulf %0, %9 : vector<8x32xf32>
    %cst_8 = arith.constant dense<0.000000e+00> : vector<8xf32>
    %19 = vector.multi_reduction <add>, %18, %cst_8 [1] : vector<8x32xf32> to vector<8xf32>
    %20 = vector.shape_cast %19 : vector<8xf32> to vector<8x1xf32>
    %21 = arith.mulf %8, %17 : vector<8x1xf32>
    %cst_9 = arith.constant 2.000000e+01 : f32
    %22 = vector.broadcast %cst_9 : f32 to vector<8x1xf32>
    %23 = arith.mulf %21, %22 : vector<8x1xf32>
    %24 = arith.mulf %20, %23 : vector<8x1xf32>
    %cst_10 = arith.constant 2.000000e+01 : f32
    %25 = vector.broadcast %cst_10 : f32 to vector<8x1xf32>
    %26 = arith.mulf %8, %25 : vector<8x1xf32>
    %c0_11 = arith.constant 0 : index
    %c0_12 = arith.constant 0 : index
    %27 = vector.load %arg3[%c0_11, %c0_12] : memref<8x32xf32, #tpu.memory_space<vmem>>, vector<8x32xf32>
    %cst_13 = arith.constant dense<0.000000e+00> : vector<8x8xf32>
    %28 = tpu.matmul %0, %27, %cst_13 {dimension_numbers = #tpu.dot_dimension_numbers<[1], [1], [0], [0], [0, 0, 1, 0], [], []>} : vector<8x32xf32>, vector<8x32xf32>, vector<8x8xf32> -> vector<8x8xf32>
    %29 = vector.broadcast %26 : vector<8x1xf32> to vector<8x8xf32>
    %30 = arith.mulf %28, %29 : vector<8x8xf32>
    %c0_14 = arith.constant 0 : index
    %c0_15 = arith.constant 0 : index
    %31 = vector.load %arg4[%c0_14, %c0_15] : memref<1x8xf32, #tpu.memory_space<vmem>>, vector<1x8xf32>
    %32 = vector.broadcast %31 : vector<1x8xf32> to vector<8x8xf32>
    %33 = arith.mulf %30, %32 : vector<8x8xf32>
    %cst_16 = arith.constant dense<0xFF800000> : vector<8xf32>
    %34 = vector.multi_reduction <maximumf>, %33, %cst_16 [1] : vector<8x8xf32> to vector<8xf32>
    %35 = vector.shape_cast %34 : vector<8xf32> to vector<8x1xf32>
    %c0_17 = arith.constant 0 : index
    %c0_18 = arith.constant 0 : index
    %36 = vector.load %arg5[%c0_17, %c0_18] : memref<8x32xf32, #tpu.memory_space<vmem>>, vector<8x32xf32>
    %cst_19 = arith.constant dense<0.000000e+00> : vector<8x8xf32>
    %37 = tpu.matmul %0, %36, %cst_19 {dimension_numbers = #tpu.dot_dimension_numbers<[1], [1], [0], [0], [0, 0, 1, 0], [], []>} : vector<8x32xf32>, vector<8x32xf32>, vector<8x8xf32> -> vector<8x8xf32>
    %38 = vector.broadcast %26 : vector<8x1xf32> to vector<8x8xf32>
    %39 = arith.mulf %37, %38 : vector<8x8xf32>
    %c0_20 = arith.constant 0 : index
    %c0_21 = arith.constant 0 : index
    %40 = vector.load %arg6[%c0_20, %c0_21] : memref<1x8xf32, #tpu.memory_space<vmem>>, vector<1x8xf32>
    %41 = vector.broadcast %40 : vector<1x8xf32> to vector<8x8xf32>
    %42 = arith.mulf %39, %41 : vector<8x8xf32>
    %cst_22 = arith.constant dense<0xFF800000> : vector<8xf32>
    %43 = vector.multi_reduction <maximumf>, %42, %cst_22 [1] : vector<8x8xf32> to vector<8xf32>
    %44 = vector.shape_cast %43 : vector<8xf32> to vector<8x1xf32>
    %45 = arith.maximumf %35, %44 : vector<8x1xf32>
    %46 = vector.broadcast %45 : vector<8x1xf32> to vector<8x8xf32>
    %47 = arith.subf %33, %46 : vector<8x8xf32>
    %48 = math.exp %47 : vector<8x8xf32>
    %cst_23 = arith.constant dense<0.000000e+00> : vector<8xf32>
    %49 = vector.multi_reduction <add>, %48, %cst_23 [1] : vector<8x8xf32> to vector<8xf32>
    %50 = vector.shape_cast %49 : vector<8xf32> to vector<8x1xf32>
    %51 = vector.broadcast %45 : vector<8x1xf32> to vector<8x8xf32>
    %52 = arith.subf %42, %51 : vector<8x8xf32>
    %53 = math.exp %52 : vector<8x8xf32>
    %cst_24 = arith.constant dense<0.000000e+00> : vector<8xf32>
    %54 = vector.multi_reduction <add>, %53, %cst_24 [1] : vector<8x8xf32> to vector<8xf32>
    %55 = vector.shape_cast %54 : vector<8xf32> to vector<8x1xf32>
    %56 = arith.addf %50, %55 : vector<8x1xf32>
    %57 = math.log %56 : vector<8x1xf32>
    %58 = arith.addf %45, %57 : vector<8x1xf32>
    %59 = arith.subf %58, %24 : vector<8x1xf32>
    %c0_25 = arith.constant 0 : index
    %c0_26 = arith.constant 0 : index
    %60 = vector.load %arg7[%c0_25, %c0_26] : memref<8x1xf32, #tpu.memory_space<vmem>>, vector<8x1xf32>
    tpu.vector_store %arg7[%c0_25, %c0_26], %59 {strides = array<i32>} : memref<8x1xf32, #tpu.memory_space<vmem>>, vector<8x1xf32>,
    return
  }
  func.func @transform_0(%arg0: i32) -> (i32, i32) {
    %c0_i32 = arith.constant 0 : i32
    %c0_i32_0 = arith.constant 0 : i32
    return %arg0, %c0_i32 : i32, i32
  }
  func.func @transform_1(%arg0: i32) -> (i32, i32) {
    %c0_i32 = arith.constant 0 : i32
    %c0_i32_0 = arith.constant 0 : i32
    return %arg0, %c0_i32 : i32, i32
  }
  func.func @transform_2(%arg0: i32) -> (i32, i32) {
    %c0_i32 = arith.constant 0 : i32
    %c0_i32_0 = arith.constant 0 : i32
    %c0_i32_1 = arith.constant 0 : i32
    return %c0_i32, %c0_i32_0 : i32, i32
  }
  func.func @transform_3(%arg0: i32) -> (i32, i32) {
    %c0_i32 = arith.constant 0 : i32
    %c0_i32_0 = arith.constant 0 : i32
    %c0_i32_1 = arith.constant 0 : i32
    return %c0_i32, %c0_i32_0 : i32, i32
  }
  func.func @transform_4(%arg0: i32) -> (i32, i32) {
    %c0_i32 = arith.constant 0 : i32
    %c0_i32_0 = arith.constant 0 : i32
    %c0_i32_1 = arith.constant 0 : i32
    return %c0_i32, %c0_i32_0 : i32, i32
  }
  func.func @transform_5(%arg0: i32) -> (i32, i32) {
    %c0_i32 = arith.constant 0 : i32
    %c0_i32_0 = arith.constant 0 : i32
    %c0_i32_1 = arith.constant 0 : i32
    return %c0_i32, %c0_i32_0 : i32, i32
  }
  func.func @transform_6(%arg0: i32) -> (i32, i32) {
    %c0_i32 = arith.constant 0 : i32
    %c0_i32_0 = arith.constant 0 : i32
    return %arg0, %c0_i32 : i32, i32
  }
}

</mosaic_0001>

<llo_original>
// kernel: tpu_custom_call.1
$region0: #{tpu_custom_call.1}
  #allocation0 [shape = 'u32[]', space=smem, size = 0x4, offset = 0x4, fixed_abs, tag = 'smem constant byte address 0x4 - core index']
  #allocation1 [shape = 'u32[72,128]{1,0:T(1,128)}', space=vmem, size = 0x9000, scoped, tag = 'internal scratch']
  %s0 = inlined_call_operand.hbm [shape: f32[8,32], index: 0, kind: input, shape index: {}]
  %s1 = inlined_call_operand.hbm [shape: f32[8,32], index: 1, kind: input, shape index: {}]
  %s2 = inlined_call_operand.hbm [shape: f32[8,32], index: 2, kind: input, shape index: {}]
  %s3 = inlined_call_operand.vmem [shape: f32[1,8], index: 3, kind: input, shape index: {}]
  %s4 = inlined_call_operand.hbm [shape: f32[8,32], index: 4, kind: input, shape index: {}]
  %s5 = inlined_call_operand.vmem [shape: f32[1,8], index: 5, kind: input, shape index: {}]
  %s6 = inlined_call_operand.vmem [shape: f32[8,1], index: 6, kind: output, shape index: {}]
  %s7 = sld [smem:[#allocation0]]
  $region50: #{tpu_custom_call.1} parent=0
    _
  %s9 = ssub.s32 1, %s7
  %s10 = scalar_select 0, %s9, %s7
  $region1: #{tpu_custom_call.1} parent=0
    #allocation2 [shape = 'u8[4096]{0}', space=vmem, size = 0x1000, scoped, tag = 'input window, operand 0, single buffered']
    #allocation3 [shape = 's32[1]{0}', space=sflag, size = 0x4, scoped, tag = 'scoped memory for tpu_custom_call.1']
    #allocation4 [shape = 'u8[4096]{0}', space=vmem, size = 0x1000, scoped, tag = 'input window, operand 1, single buffered']
    #allocation5 [shape = 's32[1]{0}', space=sflag, size = 0x4, scoped, tag = 'scoped memory for tpu_custom_call.1']
    #allocation6 [shape = 'u8[4096]{0}', space=vmem, size = 0x1000, scoped, tag = 'input window, operand 2, single buffered']
    #allocation7 [shape = 'u8[4096]{0}', space=vmem, size = 0x1000, scoped, tag = 'input window, operand 4, single buffered']
    #allocation8 [shape = 's32[1]{0}', space=sflag, size = 0x4, scoped, tag = 'scoped memory for tpu_custom_call.1']
    %11 = vsyncpa [#allocation3], 0
    %12 = vsyncpa [#allocation5], 0
    %13 = vsyncpa [#allocation8], 0
    // Predicated region
    $region2: #{tpu_custom_call.1} parent=1 // pred_check
      _
    $region3: #{tpu_custom_call.1} parent=1 // pred_check_branch
      %15 = sbr.rel (0) target = $region5
    $region4: #{tpu_custom_call.1} parent=1 // pred_region
      %17 = vsyncadd [#allocation3], 0
      %s19 = sshll.u32 %s0, 4
      %s20 = int_to_ptr.hbm [resolvable:$true] %s19
      %s21 = sshll.u32 [#allocation2], 4
      %s22 = int_to_ptr.vmem [resolvable:$true] %s21
      %24 = dma.hbm_to_vmem [thread:$0]  %s20, 128, %s22, [#allocation3]
    $region5: #{tpu_custom_call.1} parent=1 // pred_fallthru
      _
    // Predicated region
    $region6: #{tpu_custom_call.1} parent=1 // pred_check
      _
    $region7: #{tpu_custom_call.1} parent=1 // pred_check_branch
      %26 = sbr.rel (0) target = $region9
    $region8: #{tpu_custom_call.1} parent=1 // pred_region
      %28 = vsyncadd [#allocation5], 0
      %s30 = sshll.u32 %s1, 4
      %s31 = int_to_ptr.hbm [resolvable:$true] %s30
      %s32 = sshll.u32 [#allocation4], 4
      %s33 = int_to_ptr.vmem [resolvable:$true] %s32
      %35 = dma.hbm_to_vmem [thread:$0]  %s31, 128, %s33, [#allocation5]
    $region9: #{tpu_custom_call.1} parent=1 // pred_fallthru
      _
    // Predicated region
    $region10: #{tpu_custom_call.1} parent=1 // pred_check
      _
    $region11: #{tpu_custom_call.1} parent=1 // pred_check_branch
      %37 = sbr.rel (0) target = $region13
    $region12: #{tpu_custom_call.1} parent=1 // pred_region
      %39 = vsyncadd [#allocation5], 0
      %s41 = sshll.u32 %s2, 4
      %s42 = int_to_ptr.hbm [resolvable:$true] %s41
      %s43 = sshll.u32 [#allocation6], 4
      %s44 = int_to_ptr.vmem [resolvable:$true] %s43
      %46 = dma.hbm_to_vmem [thread:$0]  %s42, 128, %s44, [#allocation5]
    $region13: #{tpu_custom_call.1} parent=1 // pred_fallthru
      _
    // Predicated region
    $region14: #{tpu_custom_call.1} parent=1 // pred_check
      _
    $region15: #{tpu_custom_call.1} parent=1 // pred_check_branch
      %48 = sbr.rel (0) target = $region17
    $region16: #{tpu_custom_call.1} parent=1 // pred_region
      _
    $region17: #{tpu_custom_call.1} parent=1 // pred_fallthru
      _
    // Predicated region
    $region18: #{tpu_custom_call.1} parent=1 // pred_check
      _
    $region19: #{tpu_custom_call.1} parent=1 // pred_check_branch
      %50 = sbr.rel (0) target = $region21
    $region20: #{tpu_custom_call.1} parent=1 // pred_region
      %52 = vsyncadd [#allocation8], 0
      %s54 = sshll.u32 %s4, 4
      %s55 = int_to_ptr.hbm [resolvable:$true] %s54
      %s56 = sshll.u32 [#allocation7], 4
      %s57 = int_to_ptr.vmem [resolvable:$true] %s56
      %59 = dma.hbm_to_vmem [thread:$0]  %s55, 128, %s57, [#allocation8]
    $region21: #{tpu_custom_call.1} parent=1 // pred_fallthru
      _
    // Predicated region
    $region22: #{tpu_custom_call.1} parent=1 // pred_check
      _
    $region23: #{tpu_custom_call.1} parent=1 // pred_check_branch
      %61 = sbr.rel (0) target = $region25
    $region24: #{tpu_custom_call.1} parent=1 // pred_region
      _
    $region25: #{tpu_custom_call.1} parent=1 // pred_fallthru
      _
    // Predicated region
    $region26: #{tpu_custom_call.1} parent=1 // pred_check
      _
    $region27: #{tpu_custom_call.1} parent=1 // pred_check_branch
      %63 = sbr.rel (0) target = $region29
    $region28: #{tpu_custom_call.1} parent=1 // pred_region
      %65 = dma.done [#allocation3], 128
    $region29: #{tpu_custom_call.1} parent=1 // pred_fallthru
      _
    // Predicated region
    $region30: #{tpu_custom_call.1} parent=1 // pred_check
      _
    $region31: #{tpu_custom_call.1} parent=1 // pred_check_branch
      %67 = sbr.rel (0) target = $region33
    $region32: #{tpu_custom_call.1} parent=1 // pred_region
      %69 = dma.done [#allocation5], 128
    $region33: #{tpu_custom_call.1} parent=1 // pred_fallthru
      _
    // Predicated region
    $region34: #{tpu_custom_call.1} parent=1 // pred_check
      _
    $region35: #{tpu_custom_call.1} parent=1 // pred_check_branch
      %71 = sbr.rel (0) target = $region37
    $region36: #{tpu_custom_call.1} parent=1 // pred_region
      %73 = dma.done [#allocation5], 128
    $region37: #{tpu_custom_call.1} parent=1 // pred_fallthru
      _
    // Predicated region
    $region38: #{tpu_custom_call.1} parent=1 // pred_check
      _
    $region39: #{tpu_custom_call.1} parent=1 // pred_check_branch
      %75 = sbr.rel (0) target = $region41
    $region40: #{tpu_custom_call.1} parent=1 // pred_region
      %77 = dma.done [#allocation8], 128
    $region41: #{tpu_custom_call.1} parent=1 // pred_fallthru
      _
    %v78 = vld [vmem:[#allocation2] sm:$0xff]
    %v79 = vmul.f32 %v78, %v78
    %vm80 = vcmask 261120
    %v81 = vsel %vm80, %v79, 0.0
    %82 = vadd.xlane.f32.xlu0 %v81
    %v83 = vpop.xlane.xlu0 %82
    %v84 = vrsqrt.pop %v83
    %v85 = vmul.f32 %v84, %v83
    %v86 = vmul.f32 %v85, %v84
    %v87 = vmul.f32 0.5, %v86
    %v88 = vsub.f32 1.5, %v87
    %v89 = vmul.f32 %v84, %v88
    %v90 = vmul.f32 %v83, %v89
    %vm91 = vcmp.eq.f32.partialorder %v83, inf
    %v92 = vsel %vm91, %v83, %v90
    %vm93 = vcmp.eq.f32.partialorder %v83, 0.0
    %v94 = vand.u32 %v83, 2147483648
    %v95 = vsel %vm93, %v94, %v92
    %v96 = vmax.f32 %v95, 1e-12
    %v97 = vrcp.pop %v96
    %v98 = vmul.f32 %v96, %v97
    %v99 = vsub.f32 1.0, %v98
    %v100 = vmul.f32 %v97, %v99
    %v101 = vadd.f32 %v97, %v100
    %vm102 = vweird.f32 %v96
    %vm103 = vweird.f32 %v97
    %vm104 = vmor %vm102, %vm103
    %v105 = vsel %vm104, %v97, %v101
    %v106 = vand.u32 2147483647, %v96
    %vm107 = vcmp.eq.f32.partialorder %v106, 8.507059e+37
    %v108 = vand.u32 %v96, 2147483648
    %v109 = vor.u32 1.1754944e-38, %v108
    %v110 = vsel %vm107, %v109, %v105
    %v111 = vmul.f32 1.0, %v110
    %v112 = vld [vmem:[#allocation4] sm:$0xff]
    %v113 = vmul.f32 %v112, %v112
    %v114 = vsel %vm80, %v113, 0.0
    %115 = vadd.xlane.f32.xlu0 %v114
    %v116 = vpop.xlane.xlu0 %115
    %v117 = vrsqrt.pop %v116
    %v118 = vmul.f32 %v117, %v116
    %v119 = vmul.f32 %v118, %v117
    %v120 = vmul.f32 0.5, %v119
    %v121 = vsub.f32 1.5, %v120
    %v122 = vmul.f32 %v117, %v121
    %v123 = vmul.f32 %v116, %v122
    %vm124 = vcmp.eq.f32.partialorder %v116, inf
    %v125 = vsel %vm124, %v116, %v123
    %vm126 = vcmp.eq.f32.partialorder %v116, 0.0
    %v127 = vand.u32 %v116, 2147483648
    %v128 = vsel %vm126, %v127, %v125
    %v129 = vmax.f32 %v128, 1e-12
    %v130 = vrcp.pop %v129
    %v131 = vmul.f32 %v129, %v130
    %v132 = vsub.f32 1.0, %v131
    %v133 = vmul.f32 %v130, %v132
    %v134 = vadd.f32 %v130, %v133
    %vm135 = vweird.f32 %v129
    %vm136 = vweird.f32 %v130
    %vm137 = vmor %vm135, %vm136
    %v138 = vsel %vm137, %v130, %v134
    %v139 = vand.u32 2147483647, %v129
    %vm140 = vcmp.eq.f32.partialorder %v139, 8.507059e+37
    %v141 = vand.u32 %v129, 2147483648
    %v142 = vor.u32 1.1754944e-38, %v141
    %v143 = vsel %vm140, %v142, %v138
    %v144 = vmul.f32 1.0, %v143
    %v145 = vmul.f32 %v78, %v112
    %v146 = vsel %vm80, %v145, 0.0
    %147 = vadd.xlane.f32.xlu0 %v146
    %v148 = vpop.xlane.xlu0 %147
    %v149 = vmul.f32 %v111, %v144
    %v150 = vmul.f32 %v149, 20.0
    %v151 = vmul.f32 %v148, %v150
    %v152 = vmul.f32 %v111, 20.0
    %v153 = vld [vmem:[#allocation6] sm:$0xff]
    %v155 = vsel %vm80, %v78, 0
    %v158 = vsel %vm80, %v153, 0
    %160 = vmatpush.xpose.msra.mxu0 0.0
    %161 = vmatpush.xpose.msra.mxu0 0.0
    %162 = vmatpush.xpose.msra.mxu0 0.0
    %163 = vmatpush.xpose.msra.mxu0 0.0
    %164 = vmatpush.xpose.msra.mxu0 0.0
    %165 = vmatpush.xpose.msra.mxu0 0.0
    %166 = vmatpush.xpose.msra.mxu0 0.0
    %167 = vmatpush.xpose.msra.mxu0 0.0
    %168 = vmatpush.xpose.msra.mxu0 0.0
    %169 = vmatpush.xpose.msra.mxu0 0.0
    %170 = vmatpush.xpose.msra.mxu0 0.0
    %171 = vmatpush.xpose.msra.mxu0 0.0
    %172 = vmatpush.xpose.msra.mxu0 0.0
    %173 = vmatpush.xpose.msra.mxu0 0.0
    %174 = vmatpush.xpose.msra.mxu0 0.0
    %175 = vmatpush.xpose.msra.mxu0 %v158
    %176 = vmatmul.f32.gmra.mxu0 %v155
    %v177 = vpop.f32.mrf.mxu0
    %v178 = vadd.f32 0.0, %v177
    %179 = vdwg.mxu0
    %v180 = vmul.f32 %v178, %v152
    %v181 = vld [vmem:[%s3] sm:$0x1]
    %v183 = vperm.slane %v181, 0
    %v185 = vmul.f32 %v180, %v183
    %vm186 = vcmask 64512
    %v187 = vsel %vm186, %v185, -inf
    %188 = vmax.xlane.f32.xlu0 %v187
    %v189 = vpop.xlane.xlu0 %188
    %v190 = vld [vmem:[#allocation7] sm:$0xff]
    %v192 = vsel %vm80, %v190, 0
    %194 = vmatpush.xpose.msra.mxu0 0.0
    %195 = vmatpush.xpose.msra.mxu0 0.0
    %196 = vmatpush.xpose.msra.mxu0 0.0
    %197 = vmatpush.xpose.msra.mxu0 0.0
    %198 = vmatpush.xpose.msra.mxu0 0.0
    %199 = vmatpush.xpose.msra.mxu0 0.0
    %200 = vmatpush.xpose.msra.mxu0 0.0
    %201 = vmatpush.xpose.msra.mxu0 0.0
    %202 = vmatpush.xpose.msra.mxu0 0.0
    %203 = vmatpush.xpose.msra.mxu0 0.0
    %204 = vmatpush.xpose.msra.mxu0 0.0
    %205 = vmatpush.xpose.msra.mxu0 0.0
    %206 = vmatpush.xpose.msra.mxu0 0.0
    %207 = vmatpush.xpose.msra.mxu0 0.0
    %208 = vmatpush.xpose.msra.mxu0 0.0
    %209 = vmatpush.xpose.msra.mxu0 %v192
    %210 = vmatmul.f32.gmra.mxu0 %v155
    %v211 = vpop.f32.mrf.mxu0
    %v212 = vadd.f32 0.0, %v211
    %213 = vdwg.mxu0
    %v214 = vmul.f32 %v212, %v152
    %v215 = vld [vmem:[%s5] sm:$0x1]
    %v217 = vperm.slane %v215, 0
    %v219 = vmul.f32 %v214, %v217
    %v220 = vsel %vm186, %v219, -inf
    %221 = vmax.xlane.f32.xlu0 %v220
    %v222 = vpop.xlane.xlu0 %221
    %v223 = vmax.f32 %v189, %v222
    %v224 = vsub.f32 %v185, %v223
    %v225 = vmul.f32 %v224, 1.442695
    %v226 = vpow.pop %v225
    %v227 = vsel %vm186, %v226, 0.0
    %228 = vadd.xlane.f32.xlu0 %v227
    %v229 = vpop.xlane.xlu0 %228
    %v230 = vsub.f32 %v219, %v223
    %v231 = vmul.f32 %v230, 1.442695
    %v232 = vpow.pop %v231
    %v233 = vsel %vm186, %v232, 0.0
    %234 = vadd.xlane.f32.xlu0 %v233
    %v235 = vpop.xlane.xlu0 %234
    %v236 = vadd.f32 %v229, %v235
    %v237 = vlog2.pop %v236
    %v238 = vmul.f32 %v237, 0.6931472
    %v239 = vadd.f32 %v223, %v238
    %v240 = vsub.f32 %v239, %v151
    %vm241 = vcmask 7168
    %242 = vst.msk [vmem:[%s6] sm:$0xff] %vm241, %v240
    // Predicated region
    $region42: #{tpu_custom_call.1} parent=1 // pred_check
      _
    $region43: #{tpu_custom_call.1} parent=1 // pred_check_branch
      %244 = sbr.rel (0) target = $region45
    $region44: #{tpu_custom_call.1} parent=1 // pred_region
      _
    $region45: #{tpu_custom_call.1} parent=1 // pred_fallthru
      _
    // Predicated region
    $region46: #{tpu_custom_call.1} parent=1 // pred_check
      _
    $region47: #{tpu_custom_call.1} parent=1 // pred_check_branch
      %246 = sbr.rel (0) target = $region49
    $region48: #{tpu_custom_call.1} parent=1 // pred_region
      _
    $region49: #{tpu_custom_call.1} parent=1 // pred_fallthru
      _
    %247 = vsyncpa [#allocation3], 1
    %248 = vsyncpa [#allocation5], 1
    %249 = vsyncpa [#allocation8], 1

// kernel: tpu_custom_call.1
$region0: #{tpu_custom_call.1}
  #allocation0 [shape = 'u32[]', space=smem, size = 0x4, offset = 0x4, fixed_abs, tag = 'smem constant byte address 0x4 - core index']
  #allocation1 [shape = 'u32[72,128]{1,0:T(1,128)}', space=vmem, size = 0x9000, scoped, tag = 'internal scratch']
  %s0 = inlined_call_operand.hbm [shape: f32[8,32], index: 0, kind: input, shape index: {}]
  %s1 = inlined_call_operand.hbm [shape: f32[8,32], index: 1, kind: input, shape index: {}]
  %s2 = inlined_call_operand.hbm [shape: f32[8,32], index: 2, kind: input, shape index: {}]
  %s3 = inlined_call_operand.vmem [shape: f32[1,8], index: 3, kind: input, shape index: {}]
  %s4 = inlined_call_operand.hbm [shape: f32[8,32], index: 4, kind: input, shape index: {}]
  %s5 = inlined_call_operand.vmem [shape: f32[1,8], index: 5, kind: input, shape index: {}]
  %s6 = inlined_call_operand.vmem [shape: f32[8,1], index: 6, kind: output, shape index: {}]
  %s7 = sld [smem:[#allocation0]]
  $region50: #{tpu_custom_call.1} parent=0
    _
  %s9 = ssub.s32 1, %s7
  %s10 = scalar_select 0, %s9, %s7
  $region1: #{tpu_custom_call.1} parent=0
    #allocation2 [shape = 'u8[4096]{0}', space=vmem, size = 0x1000, scoped, tag = 'input window, operand 0, single buffered']
    #allocation3 [shape = 's32[1]{0}', space=sflag, size = 0x4, scoped, tag = 'scoped memory for tpu_custom_call.1']
    #allocation4 [shape = 'u8[4096]{0}', space=vmem, size = 0x1000, scoped, tag = 'input window, operand 1, single buffered']
    #allocation5 [shape = 's32[1]{0}', space=sflag, size = 0x4, scoped, tag = 'scoped memory for tpu_custom_call.1']
    #allocation6 [shape = 'u8[4096]{0}', space=vmem, size = 0x1000, scoped, tag = 'input window, operand 2, single buffered']
    #allocation7 [shape = 'u8[4096]{0}', space=vmem, size = 0x1000, scoped, tag = 'input window, operand 4, single buffered']
    #allocation8 [shape = 's32[1]{0}', space=sflag, size = 0x4, scoped, tag = 'scoped memory for tpu_custom_call.1']
    %11 = vsyncpa [#allocation3], 0
    %12 = vsyncpa [#allocation5], 0
    %13 = vsyncpa [#allocation8], 0
    // Predicated region
    $region2: #{tpu_custom_call.1} parent=1 // pred_check
      _
    $region3: #{tpu_custom_call.1} parent=1 // pred_check_branch
      %15 = sbr.rel (0) target = $region5
    $region4: #{tpu_custom_call.1} parent=1 // pred_region
      %17 = vsyncadd [#allocation3], 0
      %s19 = sshll.u32 %s0, 4
      %s20 = int_to_ptr.hbm [resolvable:$true] %s19
      %s21 = sshll.u32 [#allocation2], 4
      %s22 = int_to_ptr.vmem [resolvable:$true] %s21
      %24 = dma.hbm_to_vmem [thread:$0]  %s20, 128, %s22, [#allocation3]
    $region5: #{tpu_custom_call.1} parent=1 // pred_fallthru
      _
    // Predicated region
    $region6: #{tpu_custom_call.1} parent=1 // pred_check
      _
    $region7: #{tpu_custom_call.1} parent=1 // pred_check_branch
      %26 = sbr.rel (0) target = $region9
    $region8: #{tpu_custom_call.1} parent=1 // pred_region
      %28 = vsyncadd [#allocation5], 0
      %s30 = sshll.u32 %s1, 4
      %s31 = int_to_ptr.hbm [resolvable:$true] %s30
      %s32 = sshll.u32 [#allocation4], 4
      %s33 = int_to_ptr.vmem [resolvable:$true] %s32
      %35 = dma.hbm_to_vmem [thread:$0]  %s31, 128, %s33, [#allocation5]
    $region9: #{tpu_custom_call.1} parent=1 // pred_fallthru
      _
    // Predicated region
    $region10: #{tpu_custom_call.1} parent=1 // pred_check
      _
    $region11: #{tpu_custom_call.1} parent=1 // pred_check_branch
      %37 = sbr.rel (0) target = $region13
    $region12: #{tpu_custom_call.1} parent=1 // pred_region
      %39 = vsyncadd [#allocation5], 0
      %s41 = sshll.u32 %s2, 4
      %s42 = int_to_ptr.hbm [resolvable:$true] %s41
      %s43 = sshll.u32 [#allocation6], 4
      %s44 = int_to_ptr.vmem [resolvable:$true] %s43
      %46 = dma.hbm_to_vmem [thread:$0]  %s42, 128, %s44, [#allocation5]
    $region13: #{tpu_custom_call.1} parent=1 // pred_fallthru
      _
    // Predicated region
    $region14: #{tpu_custom_call.1} parent=1 // pred_check
      _
    $region15: #{tpu_custom_call.1} parent=1 // pred_check_branch
      %48 = sbr.rel (0) target = $region17
    $region16: #{tpu_custom_call.1} parent=1 // pred_region
      _
    $region17: #{tpu_custom_call.1} parent=1 // pred_fallthru
      _
    // Predicated region
    $region18: #{tpu_custom_call.1} parent=1 // pred_check
      _
    $region19: #{tpu_custom_call.1} parent=1 // pred_check_branch
      %50 = sbr.rel (0) target = $region21
    $region20: #{tpu_custom_call.1} parent=1 // pred_region
      %52 = vsyncadd [#allocation8], 0
      %s54 = sshll.u32 %s4, 4
      %s55 = int_to_ptr.hbm [resolvable:$true] %s54
      %s56 = sshll.u32 [#allocation7], 4
      %s57 = int_to_ptr.vmem [resolvable:$true] %s56
      %59 = dma.hbm_to_vmem [thread:$0]  %s55, 128, %s57, [#allocation8]
    $region21: #{tpu_custom_call.1} parent=1 // pred_fallthru
      _
    // Predicated region
    $region22: #{tpu_custom_call.1} parent=1 // pred_check
      _
    $region23: #{tpu_custom_call.1} parent=1 // pred_check_branch
      %61 = sbr.rel (0) target = $region25
    $region24: #{tpu_custom_call.1} parent=1 // pred_region
      _
    $region25: #{tpu_custom_call.1} parent=1 // pred_fallthru
      _
    // Predicated region
    $region26: #{tpu_custom_call.1} parent=1 // pred_check
      _
    $region27: #{tpu_custom_call.1} parent=1 // pred_check_branch
      %63 = sbr.rel (0) target = $region29
    $region28: #{tpu_custom_call.1} parent=1 // pred_region
      %65 = dma.done [#allocation3], 128
    $region29: #{tpu_custom_call.1} parent=1 // pred_fallthru
      _
    // Predicated region
    $region30: #{tpu_custom_call.1} parent=1 // pred_check
      _
    $region31: #{tpu_custom_call.1} parent=1 // pred_check_branch
      %67 = sbr.rel (0) target = $region33
    $region32: #{tpu_custom_call.1} parent=1 // pred_region
      %69 = dma.done [#allocation5], 128
    $region33: #{tpu_custom_call.1} parent=1 // pred_fallthru
      _
    // Predicated region
    $region34: #{tpu_custom_call.1} parent=1 // pred_check
      _
    $region35: #{tpu_custom_call.1} parent=1 // pred_check_branch
      %71 = sbr.rel (0) target = $region37
    $region36: #{tpu_custom_call.1} parent=1 // pred_region
      %73 = dma.done [#allocation5], 128
    $region37: #{tpu_custom_call.1} parent=1 // pred_fallthru
      _
    // Predicated region
    $region38: #{tpu_custom_call.1} parent=1 // pred_check
      _
    $region39: #{tpu_custom_call.1} parent=1 // pred_check_branch
      %75 = sbr.rel (0) target = $region41
    $region40: #{tpu_custom_call.1} parent=1 // pred_region
      %77 = dma.done [#allocation8], 128
    $region41: #{tpu_custom_call.1} parent=1 // pred_fallthru
      _
    %v78 = vld [vmem:[#allocation2] sm:$0xff]
    %v79 = vmul.f32 %v78, %v78
    %vm80 = vcmask 261120
    %v81 = vsel %vm80, %v79, 0.0
    %82 = vadd.xlane.f32.xlu0 %v81
    %v83 = vpop.xlane.xlu0 %82
    %v84 = vrsqrt.pop %v83
    %v85 = vmul.f32 %v84, %v83
    %v86 = vmul.f32 %v85, %v84
    %v87 = vmul.f32 0.5, %v86
    %v88 = vsub.f32 1.5, %v87
    %v89 = vmul.f32 %v84, %v88
    %v90 = vmul.f32 %v83, %v89
    %vm91 = vcmp.eq.f32.partialorder %v83, inf
    %v92 = vsel %vm91, %v83, %v90
    %vm93 = vcmp.eq.f32.partialorder %v83, 0.0
    %v94 = vand.u32 %v83, 2147483648
    %v95 = vsel %vm93, %v94, %v92
    %v96 = vmax.f32 %v95, 1e-12
    %v97 = vrcp.pop %v96
    %v98 = vmul.f32 %v96, %v97
    %v99 = vsub.f32 1.0, %v98
    %v100 = vmul.f32 %v97, %v99
    %v101 = vadd.f32 %v97, %v100
    %vm102 = vweird.f32 %v96
    %vm103 = vweird.f32 %v97
    %vm104 = vmor %vm102, %vm103
    %v105 = vsel %vm104, %v97, %v101
    %v106 = vand.u32 2147483647, %v96
    %vm107 = vcmp.eq.f32.partialorder %v106, 8.507059e+37
    %v108 = vand.u32 %v96, 2147483648
    %v109 = vor.u32 1.1754944e-38, %v108
    %v110 = vsel %vm107, %v109, %v105
    %v111 = vmul.f32 1.0, %v110
    %v112 = vld [vmem:[#allocation4] sm:$0xff]
    %v113 = vmul.f32 %v112, %v112
    %v114 = vsel %vm80, %v113, 0.0
    %115 = vadd.xlane.f32.xlu0 %v114
    %v116 = vpop.xlane.xlu0 %115
    %v117 = vrsqrt.pop %v116
    %v118 = vmul.f32 %v117, %v116
    %v119 = vmul.f32 %v118, %v117
    %v120 = vmul.f32 0.5, %v119
    %v121 = vsub.f32 1.5, %v120
    %v122 = vmul.f32 %v117, %v121
    %v123 = vmul.f32 %v116, %v122
    %vm124 = vcmp.eq.f32.partialorder %v116, inf
    %v125 = vsel %vm124, %v116, %v123
    %vm126 = vcmp.eq.f32.partialorder %v116, 0.0
    %v127 = vand.u32 %v116, 2147483648
    %v128 = vsel %vm126, %v127, %v125
    %v129 = vmax.f32 %v128, 1e-12
    %v130 = vrcp.pop %v129
    %v131 = vmul.f32 %v129, %v130
    %v132 = vsub.f32 1.0, %v131
    %v133 = vmul.f32 %v130, %v132
    %v134 = vadd.f32 %v130, %v133
    %vm135 = vweird.f32 %v129
    %vm136 = vweird.f32 %v130
    %vm137 = vmor %vm135, %vm136
    %v138 = vsel %vm137, %v130, %v134
    %v139 = vand.u32 2147483647, %v129
    %vm140 = vcmp.eq.f32.partialorder %v139, 8.507059e+37
    %v141 = vand.u32 %v129, 2147483648
    %v142 = vor.u32 1.1754944e-38, %v141
    %v143 = vsel %vm140, %v142, %v138
    %v144 = vmul.f32 1.0, %v143
    %v145 = vmul.f32 %v78, %v112
    %v146 = vsel %vm80, %v145, 0.0
    %147 = vadd.xlane.f32.xlu0 %v146
    %v148 = vpop.xlane.xlu0 %147
    %v149 = vmul.f32 %v111, %v144
    %v150 = vmul.f32 %v149, 20.0
    %v151 = vmul.f32 %v148, %v150
    %v152 = vmul.f32 %v111, 20.0
    %v153 = vld [vmem:[#allocation6] sm:$0xff]
    %v155 = vsel %vm80, %v78, 0
    %v158 = vsel %vm80, %v153, 0
    %160 = vmatpush.xpose.msra.mxu0 0.0
    %161 = vmatpush.xpose.msra.mxu0 0.0
    %162 = vmatpush.xpose.msra.mxu0 0.0
    %163 = vmatpush.xpose.msra.mxu0 0.0
    %164 = vmatpush.xpose.msra.mxu0 0.0
    %165 = vmatpush.xpose.msra.mxu0 0.0
    %166 = vmatpush.xpose.msra.mxu0 0.0
    %167 = vmatpush.xpose.msra.mxu0 0.0
    %168 = vmatpush.xpose.msra.mxu0 0.0
    %169 = vmatpush.xpose.msra.mxu0 0.0
    %170 = vmatpush.xpose.msra.mxu0 0.0
    %171 = vmatpush.xpose.msra.mxu0 0.0
    %172 = vmatpush.xpose.msra.mxu0 0.0
    %173 = vmatpush.xpose.msra.mxu0 0.0
    %174 = vmatpush.xpose.msra.mxu0 0.0
    %175 = vmatpush.xpose.msra.mxu0 %v158
    %176 = vmatmul.f32.gmra.mxu0 %v155
    %v177 = vpop.f32.mrf.mxu0
    %v178 = vadd.f32 0.0, %v177
    %179 = vdwg.mxu0
    %v180 = vmul.f32 %v178, %v152
    %v181 = vld [vmem:[%s3] sm:$0x1]
    %v183 = vperm.slane %v181, 0
    %v185 = vmul.f32 %v180, %v183
    %vm186 = vcmask 64512
    %v187 = vsel %vm186, %v185, -inf
    %188 = vmax.xlane.f32.xlu0 %v187
    %v189 = vpop.xlane.xlu0 %188
    %v190 = vld [vmem:[#allocation7] sm:$0xff]
    %v192 = vsel %vm80, %v190, 0
    %194 = vmatpush.xpose.msra.mxu0 0.0
    %195 = vmatpush.xpose.msra.mxu0 0.0
    %196 = vmatpush.xpose.msra.mxu0 0.0
    %197 = vmatpush.xpose.msra.mxu0 0.0
    %198 = vmatpush.xpose.msra.mxu0 0.0
    %199 = vmatpush.xpose.msra.mxu0 0.0
    %200 = vmatpush.xpose.msra.mxu0 0.0
    %201 = vmatpush.xpose.msra.mxu0 0.0
    %202 = vmatpush.xpose.msra.mxu0 0.0
    %203 = vmatpush.xpose.msra.mxu0 0.0
    %204 = vmatpush.xpose.msra.mxu0 0.0
    %205 = vmatpush.xpose.msra.mxu0 0.0
    %206 = vmatpush.xpose.msra.mxu0 0.0
    %207 = vmatpush.xpose.msra.mxu0 0.0
    %208 = vmatpush.xpose.msra.mxu0 0.0
    %209 = vmatpush.xpose.msra.mxu0 %v192
    %210 = vmatmul.f32.gmra.mxu0 %v155
    %v211 = vpop.f32.mrf.mxu0
    %v212 = vadd.f32 0.0, %v211
    %213 = vdwg.mxu0
    %v214 = vmul.f32 %v212, %v152
    %v215 = vld [vmem:[%s5] sm:$0x1]
    %v217 = vperm.slane %v215, 0
    %v219 = vmul.f32 %v214, %v217
    %v220 = vsel %vm186, %v219, -inf
    %221 = vmax.xlane.f32.xlu0 %v220
    %v222 = vpop.xlane.xlu0 %221
    %v223 = vmax.f32 %v189, %v222
    %v224 = vsub.f32 %v185, %v223
    %v225 = vmul.f32 %v224, 1.442695
    %v226 = vpow.pop %v225
    %v227 = vsel %vm186, %v226, 0.0
    %228 = vadd.xlane.f32.xlu0 %v227
    %v229 = vpop.xlane.xlu0 %228
    %v230 = vsub.f32 %v219, %v223
    %v231 = vmul.f32 %v230, 1.442695
    %v232 = vpow.pop %v231
    %v233 = vsel %vm186, %v232, 0.0
    %234 = vadd.xlane.f32.xlu0 %v233
    %v235 = vpop.xlane.xlu0 %234
    %v236 = vadd.f32 %v229, %v235
    %v237 = vlog2.pop %v236
    %v238 = vmul.f32 %v237, 0.6931472
    %v239 = vadd.f32 %v223, %v238
    %v240 = vsub.f32 %v239, %v151
    %vm241 = vcmask 7168
    %242 = vst.msk [vmem:[%s6] sm:$0xff] %vm241, %v240
    // Predicated region
    $region42: #{tpu_custom_call.1} parent=1 // pred_check
      _
    $region43: #{tpu_custom_call.1} parent=1 // pred_check_branch
      %244 = sbr.rel (0) target = $region45
    $region44: #{tpu_custom_call.1} parent=1 // pred_region
      _
    $region45: #{tpu_custom_call.1} parent=1 // pred_fallthru
      _
    // Predicated region
    $region46: #{tpu_custom_call.1} parent=1 // pred_check
      _
    $region47: #{tpu_custom_call.1} parent=1 // pred_check_branch
      %246 = sbr.rel (0) target = $region49
    $region48: #{tpu_custom_call.1} parent=1 // pred_region
      _
    $region49: #{tpu_custom_call.1} parent=1 // pred_fallthru
      _
    %247 = vsyncpa [#allocation3], 1
    %248 = vsyncpa [#allocation5], 1
    %249 = vsyncpa [#allocation8], 1

</llo_original>
